<compile_context>
chip_gen: v7x
topology: tpu7x:2x2x1
jax: 0.10.0
libtpu: 0.0.40
codegen_flags: <defaults>
</compile_context>

<pallas_src>
import functools

import jax
import jax.numpy as jnp
from jax.experimental import pallas as pl
from jax.experimental.pallas import tpu as pltpu

LANES = 128
SUBLANES = 8
MAX_TILE_R = 4096   # rows per block: 4096*128*4B = 2 MiB per input per buffer
ACC_R = 64          # accumulator rows (8 vregs) -> independent add chains
NUM_CORES = 2       # leading "parallel" grid axis (uses both TCs on v7x)


def _iou_kernel(pred_ref, label_ref, inter_ref, total_ref, *,
                acc_r, apply_sigmoid):
    i = pl.program_id(1)

    @pl.when(i == 0)
    def _():
        inter_ref[...] = jnp.zeros_like(inter_ref)
        total_ref[...] = jnp.zeros_like(total_ref)

    p = pred_ref[...].astype(jnp.float32)
    if apply_sigmoid:
        # exp + reciprocal both run on the EUP slot (cheaper than a VPU divide).
        p = pl.reciprocal(1.0 + jnp.exp(-p), approx=False)
    l = label_ref[...].astype(jnp.float32)

    tile_r, lanes = p.shape
    n_fold = tile_r // acc_r
    # Pure-VPU fold into acc_r rows (acc_r//8 independent accumulator vregs);
    # the expensive cross-lane reduction happens exactly once, in the wrapper.
    inter_ref[...] += (p * l).reshape(n_fold, acc_r, lanes).sum(axis=0)
    total_ref[...] += (p + l).reshape(n_fold, acc_r, lanes).sum(axis=0)


def iou_loss(prediction, label, smooth=1.0, used_sigmoid_actFun=False):
    """Pallas TPU implementation of IoULoss.forward."""
    pred_flat = prediction.reshape(-1)
    label_flat = label.reshape(-1)
    n = int(pred_flat.shape[0])
    apply_sigmoid = not used_sigmoid_actFun

    rows_full = n // LANES
    if rows_full >= NUM_CORES * MAX_TILE_R:
        num_cores, tile_r = NUM_CORES, MAX_TILE_R
    else:
        num_cores = 1
        tile_r = min(MAX_TILE_R, (rows_full // SUBLANES) * SUBLANES)

    blocks_per_core = rows_full // (num_cores * tile_r) if tile_r > 0 else 0
    rows_kernel = num_cores * blocks_per_core * tile_r
    n_kernel = rows_kernel * LANES

    inter = jnp.float32(0.0)
    total = jnp.float32(0.0)

    if rows_kernel > 0:
        acc_r = ACC_R if tile_r % ACC_R == 0 else SUBLANES

        if n % LANES == 0:
            # Copy-free reshape; the grid never visits rows past rows_kernel.
            pred2d = pred_flat.reshape(rows_full, LANES)
            label2d = label_flat.reshape(rows_full, LANES)
        else:
            # Non-lane-aligned numel: slice just the aligned prefix.
            pred2d = pred_flat[:n_kernel].reshape(rows_kernel, LANES)
            label2d = label_flat[:n_kernel].reshape(rows_kernel, LANES)

        bpc = blocks_per_core
        in_map = lambda c, i: (c * bpc + i, 0)
        out_map = lambda c, i: (c, 0, 0)

        kernel = functools.partial(
            _iou_kernel, acc_r=acc_r, apply_sigmoid=apply_sigmoid)

        inter_parts, total_parts = pl.pallas_call(
            kernel,
            out_shape=(
                jax.ShapeDtypeStruct((num_cores, acc_r, LANES), jnp.float32),
                jax.ShapeDtypeStruct((num_cores, acc_r, LANES), jnp.float32),
            ),
            grid_spec=pltpu.PrefetchScalarGridSpec(
                num_scalar_prefetch=0,
                grid=(num_cores, blocks_per_core),
                in_specs=[
                    pl.BlockSpec((tile_r, LANES), in_map),
                    pl.BlockSpec((tile_r, LANES), in_map),
                ],
                out_specs=[
                    pl.BlockSpec((None, acc_r, LANES), out_map),
                    pl.BlockSpec((None, acc_r, LANES), out_map),
                ],
            ),
            compiler_params=pltpu.CompilerParams(
                dimension_semantics=("parallel", "arbitrary")),
        )(pred2d, label2d)

        inter = inter + jnp.sum(inter_parts)
        total = total + jnp.sum(total_parts)

    if n_kernel < n:
        # Ragged tail (< num_cores*tile_r*128 elements): plain jnp reduction,
        # combined with the kernel's partial sums here.
        p_tail = pred_flat[n_kernel:].astype(jnp.float32)
        if apply_sigmoid:
            p_tail = jax.nn.sigmoid(p_tail)
        l_tail = label_flat[n_kernel:].astype(jnp.float32)
        inter = inter + jnp.sum(p_tail * l_tail)
        total = total + jnp.sum(p_tail + l_tail)

    union = total - inter
    smooth = jnp.float32(smooth)
    return 1.0 - (inter + smooth) / (union + smooth)


def iou_loss_ref(prediction, label, smooth=1.0, used_sigmoid_actFun=False):
    """Pure-JAX reference mirroring the PyTorch module."""
    p = prediction if used_sigmoid_actFun else jax.nn.sigmoid(prediction)
    p = p.reshape(-1).astype(jnp.float32)
    l = label.reshape(-1).astype(jnp.float32)
    inter = jnp.sum(p * l)
    total = jnp.sum(p + l)
    union = total - inter
    return 1.0 - (inter + smooth) / (union + smooth)


if __name__ == "__main__":
    key = jax.random.PRNGKey(0)
    k1, k2 = jax.random.split(key)

    B, C, H, W = 2, 4, 16, 16  # NCHW, matching the PyTorch convention
    prediction = jax.random.normal(k1, (B, C, H, W), dtype=jnp.float32)
    label = (jax.random.uniform(k2, (B, C, H, W)) > 0.5).astype(jnp.float32)

    out = iou_loss(prediction, label, smooth=1.0, used_sigmoid_actFun=False)
    out = jax.block_until_ready(out)

    ref = iou_loss_ref(prediction, label, smooth=1.0, used_sigmoid_actFun=False)
    assert jnp.allclose(out, ref, atol=1e-5, rtol=1e-5), (out, ref)

    # Also exercise the pre-sigmoided path.
    out2 = iou_loss(jax.nn.sigmoid(prediction), label, smooth=1.0,
                    used_sigmoid_actFun=True)
    out2 = jax.block_until_ready(out2)
    ref2 = iou_loss_ref(jax.nn.sigmoid(prediction), label, smooth=1.0,
                        used_sigmoid_actFun=True)
    assert jnp.allclose(out2, ref2, atol=1e-5, rtol=1e-5), (out2, ref2)

    print("KERNEL_OK")
</pallas_src>

<mosaic_0001>
module attributes {stable_mosaic.version = 11 : i64} {
  func.func @_iou_kernel(%arg0: i32, %arg1: i32, %arg2: memref<16x128xf32, #tpu.memory_space<vmem>>, %arg3: memref<16x128xf32, #tpu.memory_space<vmem>>, %arg4: memref<1x8x128xf32, #tpu.memory_space<vmem>>, %arg5: memref<1x8x128xf32, #tpu.memory_space<vmem>>) attributes {dimension_semantics = [#tpu.dimension_semantics<parallel>, #tpu.dimension_semantics<arbitrary>], iteration_bounds = array<i64: 1, 1>, scalar_prefetch = 0 : i64, scratch_operands = 0 : i64, tpu.core_type = #tpu.core_type<tc>, window_params = [{transform_indices = @transform_0, window_bounds = array<i64: 16, 128>}, {transform_indices = @transform_1, window_bounds = array<i64: 16, 128>}, {transform_indices = @transform_2, window_bounds = array<i64: 1, 8, 128>}, {transform_indices = @transform_3, window_bounds = array<i64: 1, 8, 128>}]} {
    %c0_i32 = arith.constant 0 : i32
    %0 = arith.cmpi eq, %arg1, %c0_i32 : i32
    %1 = arith.extui %0 : i1 to i32
    %c0_i32_0 = arith.constant 0 : i32
    %2 = arith.cmpi ne, %1, %c0_i32_0 : i32
    scf.if %2 {
      %cst_19 = arith.constant 0.000000e+00 : f32
      %29 = vector.broadcast %cst_19 : f32 to vector<8x128xf32>
      %c0_20 = arith.constant 0 : index
      %c0_21 = arith.constant 0 : index
      %c0_22 = arith.constant 0 : index
      %30 = vector.load %arg4[%c0_20, %c0_21, %c0_22] : memref<1x8x128xf32, #tpu.memory_space<vmem>>, vector<1x8x128xf32>
      %31 = vector.shape_cast %30 : vector<1x8x128xf32> to vector<8x128xf32>
      %32 = vector.shape_cast %29 : vector<8x128xf32> to vector<1x8x128xf32>
      tpu.vector_store %arg4[%c0_20, %c0_21, %c0_22], %32 {strides = array<i32>} : memref<1x8x128xf32, #tpu.memory_space<vmem>>, vector<1x8x128xf32>,
      %cst_23 = arith.constant 0.000000e+00 : f32
      %33 = vector.broadcast %cst_23 : f32 to vector<8x128xf32>
      %c0_24 = arith.constant 0 : index
      %c0_25 = arith.constant 0 : index
      %c0_26 = arith.constant 0 : index
      %34 = vector.load %arg5[%c0_24, %c0_25, %c0_26] : memref<1x8x128xf32, #tpu.memory_space<vmem>>, vector<1x8x128xf32>
      %35 = vector.shape_cast %34 : vector<1x8x128xf32> to vector<8x128xf32>
      %36 = vector.shape_cast %33 : vector<8x128xf32> to vector<1x8x128xf32>
      tpu.vector_store %arg5[%c0_24, %c0_25, %c0_26], %36 {strides = array<i32>} : memref<1x8x128xf32, #tpu.memory_space<vmem>>, vector<1x8x128xf32>,
    } else {
    }
    %c0 = arith.constant 0 : index
    %c0_1 = arith.constant 0 : index
    %3 = vector.load %arg2[%c0, %c0_1] : memref<16x128xf32, #tpu.memory_space<vmem>>, vector<16x128xf32>
    %cst = arith.constant 0.000000e+00 : f32
    %4 = vector.broadcast %cst : f32 to vector<16x128xf32>
    %5 = arith.subf %4, %3 : vector<16x128xf32>
    %6 = math.exp %5 : vector<16x128xf32>
    %cst_2 = arith.constant 1.000000e+00 : f32
    %7 = vector.broadcast %cst_2 : f32 to vector<16x128xf32>
    %8 = arith.addf %7, %6 : vector<16x128xf32>
    %9 = tpu.reciprocal %8 : vector<16x128xf32> -> vector<16x128xf32>
    %c0_3 = arith.constant 0 : index
    %c0_4 = arith.constant 0 : index
    %10 = vector.load %arg3[%c0_3, %c0_4] : memref<16x128xf32, #tpu.memory_space<vmem>>, vector<16x128xf32>
    %c0_5 = arith.constant 0 : index
    %c0_6 = arith.constant 0 : index
    %c0_7 = arith.constant 0 : index
    %11 = vector.load %arg4[%c0_5, %c0_6, %c0_7] : memref<1x8x128xf32, #tpu.memory_space<vmem>>, vector<1x8x128xf32>
    %12 = vector.shape_cast %11 : vector<1x8x128xf32> to vector<8x128xf32>
    %13 = arith.mulf %9, %10 : vector<16x128xf32>
    %14 = vector.shape_cast %13 : vector<16x128xf32> to vector<2x8x128xf32>
    %cst_8 = arith.constant dense<0.000000e+00> : vector<8x128xf32>
    %15 = vector.multi_reduction <add>, %14, %cst_8 [0] : vector<2x8x128xf32> to vector<8x128xf32>
    %16 = arith.addf %12, %15 : vector<8x128xf32>
    %c0_9 = arith.constant 0 : index
    %c0_10 = arith.constant 0 : index
    %c0_11 = arith.constant 0 : index
    %17 = vector.load %arg4[%c0_9, %c0_10, %c0_11] : memref<1x8x128xf32, #tpu.memory_space<vmem>>, vector<1x8x128xf32>
    %18 = vector.shape_cast %17 : vector<1x8x128xf32> to vector<8x128xf32>
    %19 = vector.shape_cast %16 : vector<8x128xf32> to vector<1x8x128xf32>
    tpu.vector_store %arg4[%c0_9, %c0_10, %c0_11], %19 {strides = array<i32>} : memref<1x8x128xf32, #tpu.memory_space<vmem>>, vector<1x8x128xf32>,
    %c0_12 = arith.constant 0 : index
    %c0_13 = arith.constant 0 : index
    %c0_14 = arith.constant 0 : index
    %20 = vector.load %arg5[%c0_12, %c0_13, %c0_14] : memref<1x8x128xf32, #tpu.memory_space<vmem>>, vector<1x8x128xf32>
    %21 = vector.shape_cast %20 : vector<1x8x128xf32> to vector<8x128xf32>
    %22 = arith.addf %9, %10 : vector<16x128xf32>
    %23 = vector.shape_cast %22 : vector<16x128xf32> to vector<2x8x128xf32>
    %cst_15 = arith.constant dense<0.000000e+00> : vector<8x128xf32>
    %24 = vector.multi_reduction <add>, %23, %cst_15 [0] : vector<2x8x128xf32> to vector<8x128xf32>
    %25 = arith.addf %21, %24 : vector<8x128xf32>
    %c0_16 = arith.constant 0 : index
    %c0_17 = arith.constant 0 : index
    %c0_18 = arith.constant 0 : index
    %26 = vector.load %arg5[%c0_16, %c0_17, %c0_18] : memref<1x8x128xf32, #tpu.memory_space<vmem>>, vector<1x8x128xf32>
    %27 = vector.shape_cast %26 : vector<1x8x128xf32> to vector<8x128xf32>
    %28 = vector.shape_cast %25 : vector<8x128xf32> to vector<1x8x128xf32>
    tpu.vector_store %arg5[%c0_16, %c0_17, %c0_18], %28 {strides = array<i32>} : memref<1x8x128xf32, #tpu.memory_space<vmem>>, vector<1x8x128xf32>,
    return
  }
  func.func @transform_0(%arg0: i32, %arg1: i32) -> (i32, i32) {
    %c1_i32 = arith.constant 1 : i32
    %0 = arith.muli %arg0, %c1_i32 : i32
    %1 = arith.addi %0, %arg1 : i32
    %c0_i32 = arith.constant 0 : i32
    %c0_i32_0 = arith.constant 0 : i32
    return %1, %c0_i32 : i32, i32
  }
  func.func @transform_1(%arg0: i32, %arg1: i32) -> (i32, i32) {
    %c1_i32 = arith.constant 1 : i32
    %0 = arith.muli %arg0, %c1_i32 : i32
    %1 = arith.addi %0, %arg1 : i32
    %c0_i32 = arith.constant 0 : i32
    %c0_i32_0 = arith.constant 0 : i32
    return %1, %c0_i32 : i32, i32
  }
  func.func @transform_2(%arg0: i32, %arg1: i32) -> (i32, i32, i32) {
    %c0_i32 = arith.constant 0 : i32
    %c0_i32_0 = arith.constant 0 : i32
    %c0_i32_1 = arith.constant 0 : i32
    return %arg0, %c0_i32, %c0_i32_0 : i32, i32, i32
  }
  func.func @transform_3(%arg0: i32, %arg1: i32) -> (i32, i32, i32) {
    %c0_i32 = arith.constant 0 : i32
    %c0_i32_0 = arith.constant 0 : i32
    %c0_i32_1 = arith.constant 0 : i32
    return %arg0, %c0_i32, %c0_i32_0 : i32, i32, i32
  }
}

</mosaic_0001>

<llo_original>
// kernel: tpu_custom_call.1
$region0: #{tpu_custom_call.1}
  #allocation0 [shape = 'u32[]', space=smem, size = 0x4, offset = 0x4, fixed_abs, tag = 'smem constant byte address 0x4 - core index']
  #allocation1 [shape = 'u32[144,128]{1,0:T(1,128)}', space=vmem, size = 0x12000, scoped, tag = 'internal scratch']
  %s0 = inlined_call_operand.hbm [shape: f32[16,128], index: 0, kind: input, shape index: {}]
  %s1 = inlined_call_operand.hbm [shape: f32[16,128], index: 1, kind: input, shape index: {}]
  %s2 = inlined_call_operand.hbm [shape: f32[1,8,128], index: 2, kind: output, shape index: {0}]
  %s3 = inlined_call_operand.hbm [shape: f32[1,8,128], index: 3, kind: output, shape index: {1}]
  %4 = xla_tuple %s2, %s3
  %s5 = sld [smem:[#allocation0]]
  $region38: #{tpu_custom_call.1} parent=0
    _
  %s7 = ssub.s32 1, %s5
  %s8 = scalar_select 0, %s7, %s5
  $region1: #{tpu_custom_call.1} parent=0
    #allocation2 [shape = 'u8[8192]{0}', space=vmem, size = 0x2000, scoped, tag = 'input window, operand 0, single buffered']
    #allocation3 [shape = 's32[1]{0}', space=sflag, size = 0x4, scoped, tag = 'scoped memory for tpu_custom_call.1']
    #allocation4 [shape = 's32[1]{0}', space=sflag, size = 0x4, scoped, tag = 'scoped memory for tpu_custom_call.1']
    #allocation5 [shape = 'u8[8192]{0}', space=vmem, size = 0x2000, scoped, tag = 'input window, operand 1, single buffered']
    #allocation6 [shape = 's32[1]{0}', space=sflag, size = 0x4, scoped, tag = 'scoped memory for tpu_custom_call.1']
    #allocation7 [shape = 'u8[4096]{0}', space=vmem, size = 0x1000, scoped, tag = 'output window, operand 0, single buffered']
    #allocation8 [shape = 'u8[4096]{0}', space=vmem, size = 0x1000, scoped, tag = 'output window, operand 1, single buffered']
    #allocation9 [shape = 's32[1]{0}', space=sflag, size = 0x4, scoped, tag = 'scoped memory for tpu_custom_call.1']
    %9 = vsyncpa [#allocation3], 0
    %10 = vsyncpa [#allocation6], 0
    %11 = vsyncpa [#allocation4], 0
    %12 = vsyncpa [#allocation9], 0
    // Predicated region
    $region2: #{tpu_custom_call.1} parent=1 // pred_check
      _
    $region3: #{tpu_custom_call.1} parent=1 // pred_check_branch
      %14 = sbr.rel (0) target = $region5
    $region4: #{tpu_custom_call.1} parent=1 // pred_region
      %s15 = sadd.s32 0, 0
      %s16 = smul.u32 2, %s15
      %s18 = ssub.s32 256, 256
      %19 = vsyncadd [#allocation3], %s18
      %s20 = smul.addr %s16, 128
      %s21 = scalar_lea.hbm %s0, %s20
      %s22 = sshll.u32 [#allocation2], 4
      %s23 = int_to_ptr.vmem [resolvable:$true] %s22
      %28 = dma.hbm_to_vmem [thread:$0]  %s21, 256, %s23, [#allocation3], 128, 128, 8
    $region5: #{tpu_custom_call.1} parent=1 // pred_fallthru
      _
    // Predicated region
    $region6: #{tpu_custom_call.1} parent=1 // pred_check
      _
    $region7: #{tpu_custom_call.1} parent=1 // pred_check_branch
      %30 = sbr.rel (0) target = $region9
    $region8: #{tpu_custom_call.1} parent=1 // pred_region
      %s31 = sadd.s32 0, 0
      %s32 = smul.u32 2, %s31
      %s34 = ssub.s32 256, 256
      %35 = vsyncadd [#allocation6], %s34
      %s36 = smul.addr %s32, 128
      %s37 = scalar_lea.hbm %s1, %s36
      %s38 = sshll.u32 [#allocation5], 4
      %s39 = int_to_ptr.vmem [resolvable:$true] %s38
      %44 = dma.hbm_to_vmem [thread:$0]  %s37, 256, %s39, [#allocation6], 128, 128, 8
    $region9: #{tpu_custom_call.1} parent=1 // pred_fallthru
      _
    // Predicated region
    $region10: #{tpu_custom_call.1} parent=1 // pred_check
      _
    $region11: #{tpu_custom_call.1} parent=1 // pred_check_branch
      %46 = sbr.rel (0) target = $region13
    $region12: #{tpu_custom_call.1} parent=1 // pred_region
      %47 = dma.done [#allocation3], 256
    $region13: #{tpu_custom_call.1} parent=1 // pred_fallthru
      _
    // Predicated region
    $region14: #{tpu_custom_call.1} parent=1 // pred_check
      _
    $region15: #{tpu_custom_call.1} parent=1 // pred_check_branch
      %49 = sbr.rel (0) target = $region17
    $region16: #{tpu_custom_call.1} parent=1 // pred_region
      %50 = dma.done [#allocation6], 256
    $region17: #{tpu_custom_call.1} parent=1 // pred_fallthru
      _
    %s51 = sadd.s32 0, 0
    %s52 = smul.u32 2, %s51
    %s53 = sadd.s32 0, 0
    %s54 = smul.u32 2, %s53
    %p55 = scmp.eq.s32.totalorder 0, 0
    // Predicated region
    $region18: #{tpu_custom_call.1} parent=1 // pred_check
      %p56 = pneg %p55
    $region19: #{tpu_custom_call.1} parent=1 // pred_check_branch
      %58 = sbr.rel (%p56) target = $region21
    $region20: #{tpu_custom_call.1} parent=1 // pred_region
      %59 = vst [vmem:[#allocation7] sm:$0xff] 0.0
      %60 = vst [vmem:[#allocation8] sm:$0xff] 0.0
    $region21: #{tpu_custom_call.1} parent=1 // pred_fallthru
      _
    %v61 = vld [vmem:[#allocation2] sm:$0xff]
    %v62 = vld [vmem:[#allocation2 + $0x8] sm:$0xff]
    %v63 = vsub.f32 0.0, %v61
    %v64 = vsub.f32 0.0, %v62
    %v65 = vmul.f32 %v63, 1.442695
    %v66 = vpow.pop %v65
    %v67 = vmul.f32 %v64, 1.442695
    %v68 = vpow.pop %v67
    %v69 = vadd.f32 %v66, 1.0
    %v70 = vadd.f32 %v68, 1.0
    %v71 = vrcp.pop %v69
    %v72 = vrcp.pop %v70
    %v73 = vld [vmem:[#allocation5] sm:$0xff]
    %v74 = vld [vmem:[#allocation5 + $0x8] sm:$0xff]
    %v75 = vld [vmem:[#allocation7] sm:$0xff]
    %v76 = vmul.f32 %v71, %v73
    %v77 = vmul.f32 %v72, %v74
    %v78 = vadd.f32 %v76, %v77
    %v79 = vadd.f32 %v75, %v78
    %80 = vst [vmem:[#allocation7] sm:$0xff] %v79
    %v81 = vld [vmem:[#allocation8] sm:$0xff]
    %v82 = vadd.f32 %v71, %v73
    %v83 = vadd.f32 %v72, %v74
    %v84 = vadd.f32 %v82, %v83
    %v85 = vadd.f32 %v81, %v84
    %86 = vst [vmem:[#allocation8] sm:$0xff] %v85
    // Predicated region
    $region22: #{tpu_custom_call.1} parent=1 // pred_check
      _
    $region23: #{tpu_custom_call.1} parent=1 // pred_check_branch
      %88 = sbr.rel (0) target = $region25
    $region24: #{tpu_custom_call.1} parent=1 // pred_region
      %s90 = ssub.s32 128, 128
      %91 = vsyncadd [#allocation4], %s90
      %s93 = sshll.u32 [#allocation7], 4
      %s94 = int_to_ptr.vmem [resolvable:$true] %s93
      %96 = dma.vmem_to_hbm [thread:$0]  %s94, 128, %s2, [#allocation4]
    $region25: #{tpu_custom_call.1} parent=1 // pred_fallthru
      _
    // Predicated region
    $region26: #{tpu_custom_call.1} parent=1 // pred_check
      _
    $region27: #{tpu_custom_call.1} parent=1 // pred_check_branch
      %98 = sbr.rel (0) target = $region29
    $region28: #{tpu_custom_call.1} parent=1 // pred_region
      %s100 = ssub.s32 128, 128
      %101 = vsyncadd [#allocation9], %s100
      %s103 = sshll.u32 [#allocation8], 4
      %s104 = int_to_ptr.vmem [resolvable:$true] %s103
      %106 = dma.vmem_to_hbm [thread:$0]  %s104, 128, %s3, [#allocation9]
    $region29: #{tpu_custom_call.1} parent=1 // pred_fallthru
      _
    // Predicated region
    $region30: #{tpu_custom_call.1} parent=1 // pred_check
      _
    $region31: #{tpu_custom_call.1} parent=1 // pred_check_branch
      %108 = sbr.rel (0) target = $region33
    $region32: #{tpu_custom_call.1} parent=1 // pred_region
      %109 = dma.done [#allocation4], 128
    $region33: #{tpu_custom_call.1} parent=1 // pred_fallthru
      _
    // Predicated region
    $region34: #{tpu_custom_call.1} parent=1 // pred_check
      _
    $region35: #{tpu_custom_call.1} parent=1 // pred_check_branch
      %111 = sbr.rel (0) target = $region37
    $region36: #{tpu_custom_call.1} parent=1 // pred_region
      %112 = dma.done [#allocation9], 128
    $region37: #{tpu_custom_call.1} parent=1 // pred_fallthru
      _
    %113 = vsyncpa [#allocation3], 1
    %114 = vsyncpa [#allocation6], 1
    %115 = vsyncpa [#allocation4], 1
    %116 = vsyncpa [#allocation9], 1

</llo_original>
